<compile_context>
chip_gen: v6e
topology: v6e:2x2x1
jax: 0.10.0
libtpu: 0.0.40
codegen_flags: <defaults>
</compile_context>

<pallas_src>
import jax
import jax.numpy as jnp
from jax.experimental import pallas as pl
from jax.experimental.pallas import tpu as pltpu


def _round_up(n, m):
    return ((n + m - 1) // m) * m


def mlp_kernel(x_ref, w1_ref, b1_ref, w2_ref, b2_ref, o_ref):
    # First linear: (TB, D_in) @ (D_in, H) on the MXU, bf16 operands, f32 acc.
    h = jnp.dot(x_ref[...], w1_ref[...], preferred_element_type=jnp.float32)
    # Bias + ReLU in f32 on the VPU.
    h = jnp.maximum(h + b1_ref[...], 0.0)
    # Second linear: (TB, H) @ (H, D_in), bf16 operands, f32 acc.
    o = jnp.dot(h.astype(w2_ref.dtype), w2_ref[...],
                preferred_element_type=jnp.float32)
    o = o + b2_ref[...]
    # Sigmoid: exp lands on the EUP; approx reciprocal also lands on the EUP
    # slot (frees VALU bundles vs. an f32 divide).
    e = jnp.exp(-o)
    o_ref[...] = pl.reciprocal(1.0 + e, approx=True).astype(o_ref.dtype)


def mlp_forward(x, w1, b1, w2, b2, *, tb=512):
    """x: (B, D_in); w1: (D_in, H); b1: (H,); w2: (H, D_in); b2: (D_in,)."""
    B, D_in = x.shape
    H = w1.shape[1]

    # Batch tile: as large as reasonable (up to 512 rows), multiple of 8
    # sublanes. Pad the batch so it divides evenly into tiles.
    tb = min(tb, _round_up(B, 8))
    B_pad = _round_up(B, tb)
    if B_pad != B:
        x = jnp.pad(x, ((0, B_pad - B), (0, 0)))

    # bf16 MXU operands (halves input DMA bytes); f32 accumulation in-kernel.
    x_bf16 = x.astype(jnp.bfloat16)
    w1_bf16 = w1.astype(jnp.bfloat16)
    w2_bf16 = w2.astype(jnp.bfloat16)

    # Biases stay f32 and 2-D (1, N) so they map to (sublane, lane) layout.
    b1_2d = b1.reshape(1, H).astype(jnp.float32)
    b2_2d = b2.reshape(1, D_in).astype(jnp.float32)

    grid = (B_pad // tb,)

    out = pl.pallas_call(
        mlp_kernel,
        out_shape=jax.ShapeDtypeStruct((B_pad, D_in), jnp.float32),
        grid=grid,
        in_specs=[
            # x: batch-tiled.
            pl.BlockSpec((tb, D_in), lambda i: (i, 0)),
            # Weights / biases: same block for every grid step -> VMEM-resident.
            pl.BlockSpec((D_in, H), lambda i: (0, 0)),
            pl.BlockSpec((1, H), lambda i: (0, 0)),
            pl.BlockSpec((H, D_in), lambda i: (0, 0)),
            pl.BlockSpec((1, D_in), lambda i: (0, 0)),
        ],
        out_specs=pl.BlockSpec((tb, D_in), lambda i: (i, 0)),
        compiler_params=pltpu.CompilerParams(
            # Batch tiles are independent -> parallel (2x on v7x's 2 TCs).
            dimension_semantics=("parallel",),
            # Explicit budget with headroom for v7x's 64 MiB physical VMEM.
            vmem_limit_bytes=48 * 1024 * 1024,
        ),
    )(x_bf16, w1_bf16, b1_2d, w2_bf16, b2_2d)

    return out[:B]


def reference_forward(x, w1, b1, w2, b2):
    h = jnp.maximum(x @ w1 + b1, 0.0)
    o = h @ w2 + b2
    return jax.nn.sigmoid(o)


if __name__ == "__main__":
    # Shapes implied by the module: MultilayerPerceptron(input_size, hidden_size)
    batch = 8
    input_size = 16
    hidden_size = 32

    key = jax.random.PRNGKey(0)
    kx, kw1, kb1, kw2, kb2 = jax.random.split(key, 5)

    x = jax.random.normal(kx, (batch, input_size), dtype=jnp.float32)

    # Deterministic parameter init (mimics nn.Linear's uniform(-1/sqrt(fan_in), ...))
    lim1 = 1.0 / jnp.sqrt(jnp.float32(input_size))
    lim2 = 1.0 / jnp.sqrt(jnp.float32(hidden_size))
    w1 = jax.random.uniform(kw1, (input_size, hidden_size), jnp.float32, -lim1, lim1)
    b1 = jax.random.uniform(kb1, (hidden_size,), jnp.float32, -lim1, lim1)
    w2 = jax.random.uniform(kw2, (hidden_size, input_size), jnp.float32, -lim2, lim2)
    b2 = jax.random.uniform(kb2, (input_size,), jnp.float32, -lim2, lim2)

    out = mlp_forward(x, w1, b1, w2, b2)
    out = jax.block_until_ready(out)

    ref = reference_forward(x, w1, b1, w2, b2)
    assert out.shape == (batch, input_size)
    # Tolerance covers bf16 MXU operands (~1e-2 rel on inputs) + approx rcp (~1e-3).
    assert jnp.allclose(out, ref, atol=2e-2, rtol=2e-2), "mismatch vs reference"

    print("KERNEL_OK")
</pallas_src>

<mosaic_0001>
module attributes {stable_mosaic.version = 11 : i64} {
  func.func @mlp_kernel(%arg0: i32, %arg1: memref<8x16xbf16, #tpu.memory_space<vmem>>, %arg2: memref<16x32xbf16, #tpu.memory_space<vmem>>, %arg3: memref<1x32xf32, #tpu.memory_space<vmem>>, %arg4: memref<32x16xbf16, #tpu.memory_space<vmem>>, %arg5: memref<1x16xf32, #tpu.memory_space<vmem>>, %arg6: memref<8x16xf32, #tpu.memory_space<vmem>>) attributes {dimension_semantics = [#tpu.dimension_semantics<parallel>], iteration_bounds = array<i64: 1>, scalar_prefetch = 0 : i64, scratch_operands = 0 : i64, tpu.core_type = #tpu.core_type<tc>, window_params = [{transform_indices = @transform_0, window_bounds = array<i64: 8, 16>}, {pipeline_mode = #tpu.pipeline_mode<synchronous>, transform_indices = @transform_1, window_bounds = array<i64: 16, 32>}, {pipeline_mode = #tpu.pipeline_mode<synchronous>, transform_indices = @transform_2, window_bounds = array<i64: 1, 32>}, {pipeline_mode = #tpu.pipeline_mode<synchronous>, transform_indices = @transform_3, window_bounds = array<i64: 32, 16>}, {pipeline_mode = #tpu.pipeline_mode<synchronous>, transform_indices = @transform_4, window_bounds = array<i64: 1, 16>}, {transform_indices = @transform_5, window_bounds = array<i64: 8, 16>}]} {
    %c0 = arith.constant 0 : index
    %c0_0 = arith.constant 0 : index
    %0 = vector.load %arg1[%c0, %c0_0] : memref<8x16xbf16, #tpu.memory_space<vmem>>, vector<8x16xbf16>
    %c0_1 = arith.constant 0 : index
    %c0_2 = arith.constant 0 : index
    %1 = vector.load %arg2[%c0_1, %c0_2] : memref<16x32xbf16, #tpu.memory_space<vmem>>, vector<16x32xbf16>
    %cst = arith.constant dense<0.000000e+00> : vector<8x32xf32>
    %2 = tpu.matmul %0, %1, %cst {dimension_numbers = #tpu.dot_dimension_numbers<[1], [0], [0], [1], [0, 0, 1, 1], [], []>} : vector<8x16xbf16>, vector<16x32xbf16>, vector<8x32xf32> -> vector<8x32xf32>
    %c0_3 = arith.constant 0 : index
    %c0_4 = arith.constant 0 : index
    %3 = vector.load %arg3[%c0_3, %c0_4] : memref<1x32xf32, #tpu.memory_space<vmem>>, vector<1x32xf32>
    %4 = vector.broadcast %3 : vector<1x32xf32> to vector<8x32xf32>
    %5 = arith.addf %2, %4 : vector<8x32xf32>
    %cst_5 = arith.constant 0.000000e+00 : f32
    %6 = vector.broadcast %cst_5 : f32 to vector<8x32xf32>
    %7 = arith.maximumf %5, %6 : vector<8x32xf32>
    %8 = arith.truncf %7 : vector<8x32xf32> to vector<8x32xbf16>
    %c0_6 = arith.constant 0 : index
    %c0_7 = arith.constant 0 : index
    %9 = vector.load %arg4[%c0_6, %c0_7] : memref<32x16xbf16, #tpu.memory_space<vmem>>, vector<32x16xbf16>
    %cst_8 = arith.constant dense<0.000000e+00> : vector<8x16xf32>
    %10 = tpu.matmul %8, %9, %cst_8 {dimension_numbers = #tpu.dot_dimension_numbers<[1], [0], [0], [1], [0, 0, 1, 1], [], []>} : vector<8x32xbf16>, vector<32x16xbf16>, vector<8x16xf32> -> vector<8x16xf32>
    %c0_9 = arith.constant 0 : index
    %c0_10 = arith.constant 0 : index
    %11 = vector.load %arg5[%c0_9, %c0_10] : memref<1x16xf32, #tpu.memory_space<vmem>>, vector<1x16xf32>
    %12 = vector.broadcast %11 : vector<1x16xf32> to vector<8x16xf32>
    %13 = arith.addf %10, %12 : vector<8x16xf32>
    %cst_11 = arith.constant 0.000000e+00 : f32
    %14 = vector.broadcast %cst_11 : f32 to vector<8x16xf32>
    %15 = arith.subf %14, %13 : vector<8x16xf32>
    %16 = math.exp %15 : vector<8x16xf32>
    %cst_12 = arith.constant 1.000000e+00 : f32
    %17 = vector.broadcast %cst_12 : f32 to vector<8x16xf32>
    %18 = arith.addf %17, %16 : vector<8x16xf32>
    %19 = tpu.reciprocal %18 {approx = true} : vector<8x16xf32> -> vector<8x16xf32>
    %c0_13 = arith.constant 0 : index
    %c0_14 = arith.constant 0 : index
    %20 = vector.load %arg6[%c0_13, %c0_14] : memref<8x16xf32, #tpu.memory_space<vmem>>, vector<8x16xf32>
    tpu.vector_store %arg6[%c0_13, %c0_14], %19 {strides = array<i32>} : memref<8x16xf32, #tpu.memory_space<vmem>>, vector<8x16xf32>,
    return
  }
  func.func @transform_0(%arg0: i32) -> (i32, i32) {
    %c0_i32 = arith.constant 0 : i32
    %c0_i32_0 = arith.constant 0 : i32
    return %arg0, %c0_i32 : i32, i32
  }
  func.func @transform_1(%arg0: i32) -> (i32, i32) {
    %c0_i32 = arith.constant 0 : i32
    %c0_i32_0 = arith.constant 0 : i32
    %c0_i32_1 = arith.constant 0 : i32
    return %c0_i32, %c0_i32_0 : i32, i32
  }
  func.func @transform_2(%arg0: i32) -> (i32, i32) {
    %c0_i32 = arith.constant 0 : i32
    %c0_i32_0 = arith.constant 0 : i32
    %c0_i32_1 = arith.constant 0 : i32
    return %c0_i32, %c0_i32_0 : i32, i32
  }
  func.func @transform_3(%arg0: i32) -> (i32, i32) {
    %c0_i32 = arith.constant 0 : i32
    %c0_i32_0 = arith.constant 0 : i32
    %c0_i32_1 = arith.constant 0 : i32
    return %c0_i32, %c0_i32_0 : i32, i32
  }
  func.func @transform_4(%arg0: i32) -> (i32, i32) {
    %c0_i32 = arith.constant 0 : i32
    %c0_i32_0 = arith.constant 0 : i32
    %c0_i32_1 = arith.constant 0 : i32
    return %c0_i32, %c0_i32_0 : i32, i32
  }
  func.func @transform_5(%arg0: i32) -> (i32, i32) {
    %c0_i32 = arith.constant 0 : i32
    %c0_i32_0 = arith.constant 0 : i32
    return %arg0, %c0_i32 : i32, i32
  }
}

</mosaic_0001>

<llo_original>
// kernel: tpu_custom_call.1
$region0: #{tpu_custom_call.1}
  #allocation0 [shape = 'u32[]', space=smem, size = 0x4, offset = 0x4, fixed_abs, tag = 'smem constant byte address 0x4 - core index']
  #allocation1 [shape = 'u32[144,128]{1,0:T(1,128)}', space=vmem, size = 0x12000, scoped, tag = 'internal scratch']
  %s0 = inlined_call_operand.vmem [shape: bf16[8,16], index: 0, kind: input, shape index: {}]
  %s1 = inlined_call_operand.vmem [shape: bf16[16,32], index: 1, kind: input, shape index: {}]
  %s2 = inlined_call_operand.vmem [shape: f32[1,32], index: 2, kind: input, shape index: {}]
  %s3 = inlined_call_operand.vmem [shape: bf16[32,16], index: 3, kind: input, shape index: {}]
  %s4 = inlined_call_operand.vmem [shape: f32[1,16], index: 4, kind: input, shape index: {}]
  %s5 = inlined_call_operand.hbm [shape: f32[8,16], index: 5, kind: output, shape index: {}]
  %s6 = sld [smem:[#allocation0]]
  $region30: #{tpu_custom_call.1} parent=0
    _
  %s8 = ssub.s32 1, %s6
  %s9 = scalar_select 0, %s8, %s6
  $region1: #{tpu_custom_call.1} parent=0
    #allocation2 [shape = 'u8[4096]{0}', space=vmem, size = 0x1000, scoped, tag = 'output window, operand 0, single buffered']
    #allocation3 [shape = 's32[1]{0}', space=sflag, size = 0x4, scoped, tag = 'scoped memory for tpu_custom_call.1']
    %10 = vsyncpa [#allocation3], 0
    // Predicated region
    $region2: #{tpu_custom_call.1} parent=1 // pred_check
      _
    $region3: #{tpu_custom_call.1} parent=1 // pred_check_branch
      %12 = sbr.rel (0) target = $region5
    $region4: #{tpu_custom_call.1} parent=1 // pred_region
      _
    $region5: #{tpu_custom_call.1} parent=1 // pred_fallthru
      _
    // Predicated region
    $region6: #{tpu_custom_call.1} parent=1 // pred_check
      _
    $region7: #{tpu_custom_call.1} parent=1 // pred_check_branch
      %14 = sbr.rel (0) target = $region9
    $region8: #{tpu_custom_call.1} parent=1 // pred_region
      _
    $region9: #{tpu_custom_call.1} parent=1 // pred_fallthru
      _
    // Predicated region
    $region10: #{tpu_custom_call.1} parent=1 // pred_check
      _
    $region11: #{tpu_custom_call.1} parent=1 // pred_check_branch
      %16 = sbr.rel (0) target = $region13
    $region12: #{tpu_custom_call.1} parent=1 // pred_region
      _
    $region13: #{tpu_custom_call.1} parent=1 // pred_fallthru
      _
    // Predicated region
    $region14: #{tpu_custom_call.1} parent=1 // pred_check
      _
    $region15: #{tpu_custom_call.1} parent=1 // pred_check_branch
      %18 = sbr.rel (0) target = $region17
    $region16: #{tpu_custom_call.1} parent=1 // pred_region
      _
    $region17: #{tpu_custom_call.1} parent=1 // pred_fallthru
      _
    // Predicated region
    $region18: #{tpu_custom_call.1} parent=1 // pred_check
      _
    $region19: #{tpu_custom_call.1} parent=1 // pred_check_branch
      %20 = sbr.rel (0) target = $region21
    $region20: #{tpu_custom_call.1} parent=1 // pred_region
      _
    $region21: #{tpu_custom_call.1} parent=1 // pred_fallthru
      _
    %v22 = vld [vmem:[%s0] sm:$0xf]
    %v23 = vld [vmem:[%s1] sm:$0xf]
    %v24 = vld [vmem:[%s1 + $0x4] sm:$0xf]
    %v25 = vld [vmem:[%s2] sm:$0x1]
    %v27 = vlaneseq
    %v28 = vshrl.u32 %v27, 7
    %v29 = vsub.s32 0, %v28
    %v30 = vrot.slane %v25, %v29
    %v34 = vunpack.c.l.b16 %v23
    %v35 = vunpack.c.l.b16 %v24
    %v36 = vpack.c.b16 %v35, %v34
    %vm38 = vcmask 130048
    %v40 = vsel %vm38, %v22, 0
    %42 = vmatprep.subr.bf16.mxu0 0
    %43 = vmatpush1.bf16.msra.mxu0 0
    %44 = vmatprep.subr.bf16.mxu0 0
    %45 = vmatpush1.bf16.msra.mxu0 0
    %46 = vmatprep.subr.bf16.mxu0 0
    %47 = vmatpush1.bf16.msra.mxu0 0
    %48 = vmatprep.subr.bf16.mxu0 0
    %49 = vmatpush1.bf16.msra.mxu0 0
    %50 = vmatprep.subr.bf16.mxu0 0
    %51 = vmatpush1.bf16.msra.mxu0 0
    %52 = vmatprep.subr.bf16.mxu0 0
    %53 = vmatpush1.bf16.msra.mxu0 0
    %54 = vmatprep.subr.bf16.mxu0 0
    %55 = vmatpush1.bf16.msra.mxu0 0
    %56 = vmatprep.subr.bf16.mxu0 0
    %57 = vmatpush1.bf16.msra.mxu0 %v36
    %58 = vmatprep.subr.bf16.mxu0 0
    %59 = vmatpush2.bf16.msra.mxu0 0
    %60 = vmatprep.subr.bf16.mxu0 0
    %61 = vmatpush2.bf16.msra.mxu0 0
    %62 = vmatprep.subr.bf16.mxu0 0
    %63 = vmatpush2.bf16.msra.mxu0 0
    %64 = vmatprep.subr.bf16.mxu0 0
    %65 = vmatpush2.bf16.msra.mxu0 0
    %66 = vmatprep.subr.bf16.mxu0 0
    %67 = vmatpush2.bf16.msra.mxu0 0
    %68 = vmatprep.subr.bf16.mxu0 0
    %69 = vmatpush2.bf16.msra.mxu0 0
    %70 = vmatprep.subr.bf16.mxu0 0
    %71 = vmatpush2.bf16.msra.mxu0 0
    %72 = vmatprep.subr.bf16.mxu0 0
    %73 = vmatpush2.bf16.msra.mxu0 0
    %74 = vmatprep.mubr.bf16.mxu0 0
    %75 = vmatmul.mubr.bf16.gmra.mxu0 %v40
    %v76 = vpop.f32.mrf.mxu0
    %v77 = vadd.f32 %v30, %v76
    %v78 = vpop.f32.mrf.mxu0
    %v79 = vpop.f32.mrf.mxu0
    %v80 = vpop.f32.mrf.mxu0
    %81 = vdwg.mxu0
    %v82 = vmax.f32 %v77, 0.0
    %v83 = vpack.c.bf16 %v82, %v82
    %v84 = vld [vmem:[%s3] sm:$0xf]
    %v85 = vld [vmem:[%s3 + $0x4] sm:$0xf]
    %v86 = vld [vmem:[%s3 + $0x8] sm:$0xf]
    %v87 = vld [vmem:[%s3 + $0xc] sm:$0xf]
    %v88 = vld [vmem:[%s4] sm:$0x1]
    %v90 = vlaneseq
    %v91 = vshrl.u32 %v90, 7
    %v92 = vsub.s32 0, %v91
    %v93 = vrot.slane %v88, %v92
    %v99 = vunpack.c.l.b16 %v84
    %v100 = vunpack.c.l.b16 %v85
    %v101 = vunpack.c.l.b16 %v86
    %v102 = vunpack.c.l.b16 %v87
    %v103 = vpack.c.b16 %v100, %v99
    %v104 = vpack.c.b16 %v102, %v101
    %vm107 = vcmask 261120
    %v109 = vsel %vm107, %v83, 0
    %111 = vmatprep.subr.bf16.mxu0 0
    %112 = vmatpush1.bf16.msra.mxu0 0
    %113 = vmatprep.subr.bf16.mxu0 0
    %114 = vmatpush1.bf16.msra.mxu0 0
    %115 = vmatprep.subr.bf16.mxu0 0
    %116 = vmatpush1.bf16.msra.mxu0 0
    %117 = vmatprep.subr.bf16.mxu0 0
    %118 = vmatpush1.bf16.msra.mxu0 0
    %119 = vmatprep.subr.bf16.mxu0 0
    %120 = vmatpush1.bf16.msra.mxu0 0
    %121 = vmatprep.subr.bf16.mxu0 0
    %122 = vmatpush1.bf16.msra.mxu0 0
    %123 = vmatprep.subr.bf16.mxu0 0
    %124 = vmatpush1.bf16.msra.mxu0 %v104
    %125 = vmatprep.subr.bf16.mxu0 0
    %126 = vmatpush1.bf16.msra.mxu0 %v103
    %127 = vmatprep.subr.bf16.mxu0 0
    %128 = vmatpush2.bf16.msra.mxu0 0
    %129 = vmatprep.subr.bf16.mxu0 0
    %130 = vmatpush2.bf16.msra.mxu0 0
    %131 = vmatprep.subr.bf16.mxu0 0
    %132 = vmatpush2.bf16.msra.mxu0 0
    %133 = vmatprep.subr.bf16.mxu0 0
    %134 = vmatpush2.bf16.msra.mxu0 0
    %135 = vmatprep.subr.bf16.mxu0 0
    %136 = vmatpush2.bf16.msra.mxu0 0
    %137 = vmatprep.subr.bf16.mxu0 0
    %138 = vmatpush2.bf16.msra.mxu0 0
    %139 = vmatprep.subr.bf16.mxu0 0
    %140 = vmatpush2.bf16.msra.mxu0 0
    %141 = vmatprep.subr.bf16.mxu0 0
    %142 = vmatpush2.bf16.msra.mxu0 0
    %143 = vmatprep.mubr.bf16.mxu0 0
    %144 = vmatmul.mubr.bf16.gmra.mxu0 %v109
    %v145 = vpop.f32.mrf.mxu0
    %v146 = vadd.f32 %v93, %v145
    %v147 = vpop.f32.mrf.mxu0
    %v148 = vpop.f32.mrf.mxu0
    %v149 = vpop.f32.mrf.mxu0
    %150 = vdwg.mxu0
    %v151 = vsub.f32 0.0, %v146
    %v152 = vmul.f32 %v151, 1.442695
    %v153 = vpow.pop %v152
    %v154 = vadd.f32 %v153, 1.0
    %v155 = vrcp.pop %v154
    %156 = vst.msk [vmem:[#allocation2] sm:$0xff] %vm38, %v155
    // Predicated region
    $region22: #{tpu_custom_call.1} parent=1 // pred_check
      _
    $region23: #{tpu_custom_call.1} parent=1 // pred_check_branch
      %158 = sbr.rel (0) target = $region25
    $region24: #{tpu_custom_call.1} parent=1 // pred_region
      %s160 = ssub.s32 128, 128
      %161 = vsyncadd [#allocation3], %s160
      %s163 = sshll.u32 [#allocation2], 4
      %s164 = int_to_ptr.vmem [resolvable:$true] %s163
      %166 = dma.vmem_to_hbm [thread:$0]  %s164, 128, %s5, [#allocation3]
    $region25: #{tpu_custom_call.1} parent=1 // pred_fallthru
      _
    // Predicated region
    $region26: #{tpu_custom_call.1} parent=1 // pred_check
      _
    $region27: #{tpu_custom_call.1} parent=1 // pred_check_branch
      %168 = sbr.rel (0) target = $region29
    $region28: #{tpu_custom_call.1} parent=1 // pred_region
      %169 = dma.done [#allocation3], 128
    $region29: #{tpu_custom_call.1} parent=1 // pred_fallthru
      _
    %170 = vsyncpa [#allocation3], 1

</llo_original>
